<compile_context>
chip_gen: v7x
topology: tpu7x:2x2x1
jax: 0.10.0
libtpu: 0.0.40
codegen_flags: <defaults>
</compile_context>

<pallas_src>
import functools

import jax
import jax.numpy as jnp
from jax.experimental import pallas as pl
from jax.experimental.pallas import tpu as pltpu


def _mlp_kernel(x_ref, w1_ref, b1_ref, w2_ref, b2_ref, w3_ref, b3_ref, o_ref):
    """Fused 3-layer MLP on one (row-packed) batch tile: (Linear+ReLU) x2 -> Linear.

    x arrives f32 and is cast to the weights' dtype (bf16) on the VPU; matmuls run on the
    MXU with f32 accumulation; bias add + ReLU stay in f32 (v5e-safe).
    """
    x = x_ref[...].astype(w1_ref.dtype)                       # f32 -> bf16 (free VPU op)
    h = jnp.dot(x, w1_ref[...], preferred_element_type=jnp.float32) + b1_ref[...]
    h = jnp.maximum(h, 0.0)                                    # ReLU (f32, VPU)
    h = jnp.dot(h.astype(w2_ref.dtype), w2_ref[...],
                preferred_element_type=jnp.float32) + b2_ref[...]
    h = jnp.maximum(h, 0.0)                                    # ReLU (f32, VPU)
    o = jnp.dot(h.astype(w3_ref.dtype), w3_ref[...],
                preferred_element_type=jnp.float32) + b3_ref[...]
    o_ref[...] = o.astype(o_ref.dtype)


def _cdiv(a, b):
    return -(-a // b)


def _round_up(n, m):
    return _cdiv(n, m) * m


def _block_diag(w, pack):
    """(din, dout) -> block-diagonal (pack*din, pack*dout) with `w` on the diagonal."""
    if pack == 1:
        return w
    din, dout = w.shape
    eye = jnp.eye(pack, dtype=w.dtype)
    return jnp.einsum("ij,kl->ikjl", eye, w).reshape(pack * din, pack * dout)


def _default_pack():
    """Rows packed per MXU row: 4 on 256-wide MXUs (v6e/v7x), 2 on v5e (128x128 MXU)."""
    try:
        kind = jax.devices()[0].device_kind.lower()
    except Exception:
        return 4
    if "v5 lite" in kind or "v5lite" in kind or "v5e" in kind:
        return 2
    return 4


@functools.partial(
    jax.jit, static_argnames=("tm", "pack", "small_batch_threshold", "compute_dtype"))
def linear_extractor_forward(x, w1, b1, w2, b2, w3, b3, *, tm=2048, pack=None,
                             small_batch_threshold=256, compute_dtype=jnp.bfloat16):
    """Pallas forward. x: (B, D_in) f32. Weights (D_in,H), (H,H), (H,D_out); biases (1, .)."""
    B, D = x.shape
    H = w1.shape[1]
    O = w3.shape[1]
    out_dtype = jnp.float32

    if pack is None:
        pack = _default_pack()

    # --- row packing (wrapper-side, reshape only) --------------------------------------
    if B <= small_batch_threshold:
        # tiny pad so the packed M is a sublane multiple; negligible at B <= 256.
        Bp = _round_up(max(B, 1), 8 * pack)
    else:
        Bp = _round_up(B, pack)          # no-op (no pad, no slice) when B % pack == 0
    if Bp != B:
        x = jnp.pad(x, ((0, Bp - B), (0, 0)))
    Bq = Bp // pack
    Dq, Hq, Oq = pack * D, pack * H, pack * O
    xq = x.reshape(Bq, Dq)               # free row-major reshape, x stays f32 in HBM

    # Block-diagonal weights (<= 256x256, bf16, VMEM-resident); biases tiled, kept f32.
    w1b = _block_diag(w1, pack).astype(compute_dtype)
    w2b = _block_diag(w2, pack).astype(compute_dtype)
    w3b = _block_diag(w3, pack).astype(compute_dtype)
    b1b = jnp.tile(b1, (1, pack))
    b2b = jnp.tile(b2, (1, pack))
    b3b = jnp.tile(b3, (1, pack))

    if B <= small_batch_threshold:
        # Grid-free path: whole (packed) problem in VMEM, no pipeline / per-step overhead.
        out = pl.pallas_call(
            _mlp_kernel,
            out_shape=jax.ShapeDtypeStruct((Bq, Oq), out_dtype),
        )(xq, w1b, b1b, w2b, b2b, w3b, b3b)
    else:
        # Gridded path: stream tm-row (tmq packed-row) tiles of x; weights stay resident.
        tmq = max(8, tm // pack)
        n_steps = _cdiv(Bq, tmq)
        if n_steps < 2:
            # Guarantee >= 2 "parallel" steps so both v7x TensorCores get work.
            tmq = max(8, _round_up(_cdiv(Bq, 2), 8))
            n_steps = _cdiv(Bq, tmq)
        out = pl.pallas_call(
            _mlp_kernel,
            out_shape=jax.ShapeDtypeStruct((Bq, Oq), out_dtype),
            grid_spec=pltpu.PrefetchScalarGridSpec(
                num_scalar_prefetch=0,
                grid=(n_steps,),
                in_specs=[
                    pl.BlockSpec((tmq, Dq), lambda i: (i, 0)),   # packed x tile (streamed)
                    pl.BlockSpec((Dq, Hq), lambda i: (0, 0)),    # W1 block-diag (resident)
                    pl.BlockSpec((1, Hq), lambda i: (0, 0)),     # b1
                    pl.BlockSpec((Hq, Hq), lambda i: (0, 0)),    # W2 block-diag
                    pl.BlockSpec((1, Hq), lambda i: (0, 0)),     # b2
                    pl.BlockSpec((Hq, Oq), lambda i: (0, 0)),    # W3 block-diag
                    pl.BlockSpec((1, Oq), lambda i: (0, 0)),     # b3
                ],
                out_specs=pl.BlockSpec((tmq, Oq), lambda i: (i, 0)),
            ),
            compiler_params=pltpu.CompilerParams(
                dimension_semantics=("parallel",),
            ),
        )(xq, w1b, b1b, w2b, b2b, w3b, b3b)

    out = out.reshape(Bp, O)              # free row-major un-packing
    return out[:B] if Bp != B else out


def init_params(key, inputs_dim, hidden_dim, outputs_dim):
    """Deterministic init mimicking nn.Linear's uniform(-1/sqrt(fan_in), 1/sqrt(fan_in))."""
    dims = [(inputs_dim, hidden_dim), (hidden_dim, hidden_dim), (hidden_dim, outputs_dim)]
    params = []
    for (fan_in, fan_out) in dims:
        key, kw, kb = jax.random.split(key, 3)
        bound = 1.0 / jnp.sqrt(fan_in)
        w = jax.random.uniform(kw, (fan_in, fan_out), jnp.float32, -bound, bound)
        b = jax.random.uniform(kb, (1, fan_out), jnp.float32, -bound, bound)
        params += [w, b]
    return params


def _reference(x, w1, b1, w2, b2, w3, b3):
    """Pure-f32 JAX reference matching the PyTorch module."""
    h = jnp.maximum(x @ w1 + b1, 0.0)
    h = jnp.maximum(h @ w2 + b2, 0.0)
    return h @ w3 + b3


if __name__ == "__main__":
    key = jax.random.PRNGKey(0)

    inputs_dim = 32
    expansion_factor = 2.0
    hidden_dim = int(expansion_factor * inputs_dim)   # 64
    outputs_dim = 8

    key, kx_small, kx_big = jax.random.split(key, 3)
    w1, b1, w2, b2, w3, b3 = init_params(key, inputs_dim, hidden_dim, outputs_dim)

    # --- small, odd batch: grid-free path + minimal pack padding ---
    x_small = jax.random.normal(kx_small, (13, inputs_dim), jnp.float32)
    out_small = jax.block_until_ready(
        linear_extractor_forward(x_small, w1, b1, w2, b2, w3, b3))
    ref_small = _reference(x_small, w1, b1, w2, b2, w3, b3)
    assert out_small.shape == (13, outputs_dim)
    # bf16 MXU inputs -> loosened tolerance vs. the f32 reference.
    assert jnp.allclose(out_small, ref_small, atol=5e-2, rtol=5e-2), "small-batch mismatch"

    # --- larger batch: gridded "parallel" path with >= 2 steps and a ragged last block ---
    x_big = jax.random.normal(kx_big, (600, inputs_dim), jnp.float32)
    out_big = jax.block_until_ready(
        linear_extractor_forward(x_big, w1, b1, w2, b2, w3, b3))
    ref_big = _reference(x_big, w1, b1, w2, b2, w3, b3)
    assert out_big.shape == (600, outputs_dim)
    assert jnp.allclose(out_big, ref_big, atol=5e-2, rtol=5e-2), "large-batch mismatch"

    print("KERNEL_OK")
</pallas_src>

<mosaic_0001>
module attributes {stable_mosaic.version = 11 : i64} {
  func.func @_mlp_kernel(%arg0: memref<8x128xf32, #tpu.memory_space<vmem>>, %arg1: memref<128x256xbf16, #tpu.memory_space<vmem>>, %arg2: memref<1x256xf32, #tpu.memory_space<vmem>>, %arg3: memref<256x256xbf16, #tpu.memory_space<vmem>>, %arg4: memref<1x256xf32, #tpu.memory_space<vmem>>, %arg5: memref<256x32xbf16, #tpu.memory_space<vmem>>, %arg6: memref<1x32xf32, #tpu.memory_space<vmem>>, %arg7: memref<8x32xf32, #tpu.memory_space<vmem>>) attributes {dimension_semantics = [], scalar_prefetch = 0 : i64, scratch_operands = 0 : i64, tpu.core_type = #tpu.core_type<tc>} {
    %c0 = arith.constant 0 : index
    %c0_0 = arith.constant 0 : index
    %0 = vector.load %arg0[%c0, %c0_0] : memref<8x128xf32, #tpu.memory_space<vmem>>, vector<8x128xf32>
    %1 = arith.truncf %0 : vector<8x128xf32> to vector<8x128xbf16>
    %c0_1 = arith.constant 0 : index
    %c0_2 = arith.constant 0 : index
    %2 = vector.load %arg1[%c0_1, %c0_2] : memref<128x256xbf16, #tpu.memory_space<vmem>>, vector<128x256xbf16>
    %cst = arith.constant dense<0.000000e+00> : vector<8x256xf32>
    %3 = tpu.matmul %1, %2, %cst {dimension_numbers = #tpu.dot_dimension_numbers<[1], [0], [0], [1], [0, 0, 1, 1], [], []>} : vector<8x128xbf16>, vector<128x256xbf16>, vector<8x256xf32> -> vector<8x256xf32>
    %c0_3 = arith.constant 0 : index
    %c0_4 = arith.constant 0 : index
    %4 = vector.load %arg2[%c0_3, %c0_4] : memref<1x256xf32, #tpu.memory_space<vmem>>, vector<1x256xf32>
    %5 = vector.broadcast %4 : vector<1x256xf32> to vector<8x256xf32>
    %6 = arith.addf %3, %5 : vector<8x256xf32>
    %cst_5 = arith.constant 0.000000e+00 : f32
    %7 = vector.broadcast %cst_5 : f32 to vector<8x256xf32>
    %8 = arith.maximumf %6, %7 : vector<8x256xf32>
    %9 = arith.truncf %8 : vector<8x256xf32> to vector<8x256xbf16>
    %c0_6 = arith.constant 0 : index
    %c0_7 = arith.constant 0 : index
    %10 = vector.load %arg3[%c0_6, %c0_7] : memref<256x256xbf16, #tpu.memory_space<vmem>>, vector<256x256xbf16>
    %cst_8 = arith.constant dense<0.000000e+00> : vector<8x256xf32>
    %11 = tpu.matmul %9, %10, %cst_8 {dimension_numbers = #tpu.dot_dimension_numbers<[1], [0], [0], [1], [0, 0, 1, 1], [], []>} : vector<8x256xbf16>, vector<256x256xbf16>, vector<8x256xf32> -> vector<8x256xf32>
    %c0_9 = arith.constant 0 : index
    %c0_10 = arith.constant 0 : index
    %12 = vector.load %arg4[%c0_9, %c0_10] : memref<1x256xf32, #tpu.memory_space<vmem>>, vector<1x256xf32>
    %13 = vector.broadcast %12 : vector<1x256xf32> to vector<8x256xf32>
    %14 = arith.addf %11, %13 : vector<8x256xf32>
    %cst_11 = arith.constant 0.000000e+00 : f32
    %15 = vector.broadcast %cst_11 : f32 to vector<8x256xf32>
    %16 = arith.maximumf %14, %15 : vector<8x256xf32>
    %17 = arith.truncf %16 : vector<8x256xf32> to vector<8x256xbf16>
    %c0_12 = arith.constant 0 : index
    %c0_13 = arith.constant 0 : index
    %18 = vector.load %arg5[%c0_12, %c0_13] : memref<256x32xbf16, #tpu.memory_space<vmem>>, vector<256x32xbf16>
    %cst_14 = arith.constant dense<0.000000e+00> : vector<8x32xf32>
    %19 = tpu.matmul %17, %18, %cst_14 {dimension_numbers = #tpu.dot_dimension_numbers<[1], [0], [0], [1], [0, 0, 1, 1], [], []>} : vector<8x256xbf16>, vector<256x32xbf16>, vector<8x32xf32> -> vector<8x32xf32>
    %c0_15 = arith.constant 0 : index
    %c0_16 = arith.constant 0 : index
    %20 = vector.load %arg6[%c0_15, %c0_16] : memref<1x32xf32, #tpu.memory_space<vmem>>, vector<1x32xf32>
    %21 = vector.broadcast %20 : vector<1x32xf32> to vector<8x32xf32>
    %22 = arith.addf %19, %21 : vector<8x32xf32>
    %c0_17 = arith.constant 0 : index
    %c0_18 = arith.constant 0 : index
    %23 = vector.load %arg7[%c0_17, %c0_18] : memref<8x32xf32, #tpu.memory_space<vmem>>, vector<8x32xf32>
    tpu.vector_store %arg7[%c0_17, %c0_18], %22 {strides = array<i32>} : memref<8x32xf32, #tpu.memory_space<vmem>>, vector<8x32xf32>,
    return
  }
}

</mosaic_0001>

<llo_original>
// kernel: linear_extractor_forward.1
$region0: #{linear_extractor_forward.1}
  #allocation0 [shape = 'u32[]', space=smem, size = 0x4, offset = 0x4, fixed_abs, tag = 'smem constant byte address 0x4 - core index']
  #allocation1 [shape = 'u32[144,128]{1,0:T(1,128)}', space=vmem, size = 0x12000, scoped, tag = 'internal scratch']
  %s0 = inlined_call_operand.vmem [shape: f32[8,128], index: 0, kind: input, shape index: {}]
  %s1 = inlined_call_operand.vmem [shape: bf16[128,256], index: 1, kind: input, shape index: {}]
  %s2 = inlined_call_operand.vmem [shape: f32[1,256], index: 2, kind: input, shape index: {}]
  %s3 = inlined_call_operand.vmem [shape: bf16[256,256], index: 3, kind: input, shape index: {}]
  %s4 = inlined_call_operand.vmem [shape: f32[1,256], index: 4, kind: input, shape index: {}]
  %s5 = inlined_call_operand.vmem [shape: bf16[256,32], index: 5, kind: input, shape index: {}]
  %s6 = inlined_call_operand.vmem [shape: f32[1,32], index: 6, kind: input, shape index: {}]
  %s7 = inlined_call_operand.vmem [shape: f32[8,32], index: 7, kind: output, shape index: {}]
  %s8 = sld [smem:[#allocation0]]
  $region38: #{linear_extractor_forward.1} parent=0
    _
  %s10 = ssub.s32 1, %s8
  %s11 = scalar_select 0, %s10, %s8
  // Predicated region
  $region2: #{linear_extractor_forward.1} parent=0 // pred_check
    _
  $region3: #{linear_extractor_forward.1} parent=0 // pred_check_branch
    %13 = sbr.rel (0) target = $region5
  $region4: #{linear_extractor_forward.1} parent=0 // pred_region
    _
  $region5: #{linear_extractor_forward.1} parent=0 // pred_fallthru
    _
  // Predicated region
  $region6: #{linear_extractor_forward.1} parent=0 // pred_check
    _
  $region7: #{linear_extractor_forward.1} parent=0 // pred_check_branch
    %15 = sbr.rel (0) target = $region9
  $region8: #{linear_extractor_forward.1} parent=0 // pred_region
    _
  $region9: #{linear_extractor_forward.1} parent=0 // pred_fallthru
    _
  // Predicated region
  $region10: #{linear_extractor_forward.1} parent=0 // pred_check
    _
  $region11: #{linear_extractor_forward.1} parent=0 // pred_check_branch
    %17 = sbr.rel (0) target = $region13
  $region12: #{linear_extractor_forward.1} parent=0 // pred_region
    _
  $region13: #{linear_extractor_forward.1} parent=0 // pred_fallthru
    _
  // Predicated region
  $region14: #{linear_extractor_forward.1} parent=0 // pred_check
    _
  $region15: #{linear_extractor_forward.1} parent=0 // pred_check_branch
    %19 = sbr.rel (0) target = $region17
  $region16: #{linear_extractor_forward.1} parent=0 // pred_region
    _
  $region17: #{linear_extractor_forward.1} parent=0 // pred_fallthru
    _
  // Predicated region
  $region18: #{linear_extractor_forward.1} parent=0 // pred_check
    _
  $region19: #{linear_extractor_forward.1} parent=0 // pred_check_branch
    %21 = sbr.rel (0) target = $region21
  $region20: #{linear_extractor_forward.1} parent=0 // pred_region
    _
  $region21: #{linear_extractor_forward.1} parent=0 // pred_fallthru
    _
  // Predicated region
  $region22: #{linear_extractor_forward.1} parent=0 // pred_check
    _
  $region23: #{linear_extractor_forward.1} parent=0 // pred_check_branch
    %23 = sbr.rel (0) target = $region25
  $region24: #{linear_extractor_forward.1} parent=0 // pred_region
    _
  $region25: #{linear_extractor_forward.1} parent=0 // pred_fallthru
    _
  // Predicated region
  $region26: #{linear_extractor_forward.1} parent=0 // pred_check
    _
  $region27: #{linear_extractor_forward.1} parent=0 // pred_check_branch
    %25 = sbr.rel (0) target = $region29
  $region28: #{linear_extractor_forward.1} parent=0 // pred_region
    _
  $region29: #{linear_extractor_forward.1} parent=0 // pred_fallthru
    _
  %v27 = vld [vmem:[%s0] sm:$0xff]
  %v28 = vpack.c.bf16 %v27, %v27
  %v29 = vld [vmem:[%s1] sm:$0xff]
  %v30 = vld [vmem:[%s1 + $0x8] sm:$0xff]
  %v31 = vld [vmem:[%s1 + $0x10] sm:$0xff]
  %v32 = vld [vmem:[%s1 + $0x18] sm:$0xff]
  %v33 = vld [vmem:[%s1 + $0x20] sm:$0xff]
  %v34 = vld [vmem:[%s1 + $0x28] sm:$0xff]
  %v35 = vld [vmem:[%s1 + $0x30] sm:$0xff]
  %v36 = vld [vmem:[%s1 + $0x38] sm:$0xff]
  %v37 = vld [vmem:[%s1 + $0x40] sm:$0xff]
  %v38 = vld [vmem:[%s1 + $0x48] sm:$0xff]
  %v39 = vld [vmem:[%s1 + $0x50] sm:$0xff]
  %v40 = vld [vmem:[%s1 + $0x58] sm:$0xff]
  %v41 = vld [vmem:[%s1 + $0x60] sm:$0xff]
  %v42 = vld [vmem:[%s1 + $0x68] sm:$0xff]
  %v43 = vld [vmem:[%s1 + $0x70] sm:$0xff]
  %v44 = vld [vmem:[%s1 + $0x78] sm:$0xff]
  %v45 = vld [vmem:[%s2] sm:$0x3]
  %v47 = vlaneseq
  %v48 = vshrl.u32 %v47, 7
  %v49 = vsub.s32 0, %v48
  %v50 = vrot.slane %v45, %v49
  %v51 = vlaneseq
  %v52 = vshrl.u32 %v51, 7
  %v53 = vsub.s32 1, %v52
  %v54 = vrot.slane %v45, %v53
  %v73 = vunpack.c.l.b16 %v29
  %v74 = vunpack.c.h.b16 %v29
  %v75 = vunpack.c.l.b16 %v30
  %v76 = vunpack.c.h.b16 %v30
  %v77 = vunpack.c.l.b16 %v31
  %v78 = vunpack.c.h.b16 %v31
  %v79 = vunpack.c.l.b16 %v32
  %v80 = vunpack.c.h.b16 %v32
  %v81 = vunpack.c.l.b16 %v33
  %v82 = vunpack.c.h.b16 %v33
  %v83 = vunpack.c.l.b16 %v34
  %v84 = vunpack.c.h.b16 %v34
  %v85 = vunpack.c.l.b16 %v35
  %v86 = vunpack.c.h.b16 %v35
  %v87 = vunpack.c.l.b16 %v36
  %v88 = vunpack.c.h.b16 %v36
  %v89 = vunpack.c.l.b16 %v37
  %v90 = vunpack.c.h.b16 %v37
  %v91 = vunpack.c.l.b16 %v38
  %v92 = vunpack.c.h.b16 %v38
  %v93 = vunpack.c.l.b16 %v39
  %v94 = vunpack.c.h.b16 %v39
  %v95 = vunpack.c.l.b16 %v40
  %v96 = vunpack.c.h.b16 %v40
  %v97 = vunpack.c.l.b16 %v41
  %v98 = vunpack.c.h.b16 %v41
  %v99 = vunpack.c.l.b16 %v42
  %v100 = vunpack.c.h.b16 %v42
  %v101 = vunpack.c.l.b16 %v43
  %v102 = vunpack.c.h.b16 %v43
  %v103 = vunpack.c.l.b16 %v44
  %v104 = vunpack.c.h.b16 %v44
  %v105 = vpack.c.b16 %v75, %v73
  %v106 = vpack.c.b16 %v76, %v74
  %v107 = vpack.c.b16 %v79, %v77
  %v108 = vpack.c.b16 %v80, %v78
  %v109 = vpack.c.b16 %v83, %v81
  %v110 = vpack.c.b16 %v84, %v82
  %v111 = vpack.c.b16 %v87, %v85
  %v112 = vpack.c.b16 %v88, %v86
  %v113 = vpack.c.b16 %v91, %v89
  %v114 = vpack.c.b16 %v92, %v90
  %v115 = vpack.c.b16 %v95, %v93
  %v116 = vpack.c.b16 %v96, %v94
  %v117 = vpack.c.b16 %v99, %v97
  %v118 = vpack.c.b16 %v100, %v98
  %v119 = vpack.c.b16 %v103, %v101
  %v120 = vpack.c.b16 %v104, %v102
  %137 = vmatprep.subr.bf16.mxu0 %v106
  %138 = vmatpush1.bf16.msra.mxu0 %v105
  %139 = vmatprep.subr.bf16.mxu0 %v108
  %140 = vmatpush1.bf16.msra.mxu0 %v107
  %141 = vmatprep.subr.bf16.mxu0 %v110
  %142 = vmatpush1.bf16.msra.mxu0 %v109
  %143 = vmatprep.subr.bf16.mxu0 %v112
  %144 = vmatpush1.bf16.msra.mxu0 %v111
  %145 = vmatprep.subr.bf16.mxu0 %v114
  %146 = vmatpush1.bf16.msra.mxu0 %v113
  %147 = vmatprep.subr.bf16.mxu0 %v116
  %148 = vmatpush1.bf16.msra.mxu0 %v115
  %149 = vmatprep.subr.bf16.mxu0 %v118
  %150 = vmatpush1.bf16.msra.mxu0 %v117
  %151 = vmatprep.subr.bf16.mxu0 %v120
  %152 = vmatpush1.bf16.msra.mxu0 %v119
  %153 = vmatprep.subr.bf16.mxu0 0
  %154 = vmatpush1.bf16.msra.mxu0 0
  %155 = vmatprep.subr.bf16.mxu0 0
  %156 = vmatpush1.bf16.msra.mxu0 0
  %157 = vmatprep.subr.bf16.mxu0 0
  %158 = vmatpush1.bf16.msra.mxu0 0
  %159 = vmatprep.subr.bf16.mxu0 0
  %160 = vmatpush1.bf16.msra.mxu0 0
  %161 = vmatprep.subr.bf16.mxu0 0
  %162 = vmatpush1.bf16.msra.mxu0 0
  %163 = vmatprep.subr.bf16.mxu0 0
  %164 = vmatpush1.bf16.msra.mxu0 0
  %165 = vmatprep.subr.bf16.mxu0 0
  %166 = vmatpush1.bf16.msra.mxu0 0
  %167 = vmatprep.subr.bf16.mxu0 0
  %168 = vmatpush1.bf16.msra.mxu0 0
  %169 = vmatprep.mubr.bf16.mxu0 0
  %170 = vmatmul.mubr.bf16.gmra.mrb[0].mxu0 %v28
  %v171 = vpop.f32.mrb[0].mxu0
  %v172 = vadd.f32 %v50, %v171
  %v173 = vpop.f32.mrb[0].mxu0
  %v174 = vadd.f32 %v54, %v173
  %v175 = vpop.f32.mrb[0].mxu0
  %v176 = vpop.f32.mrb[0].mxu0
  %177 = vdwg.mxu0
  %v178 = vmax.f32 %v172, 0.0
  %v179 = vmax.f32 %v174, 0.0
  %v180 = vpack.c.bf16 %v178, %v178
  %v181 = vpack.c.bf16 %v179, %v179
  %v182 = vld [vmem:[%s3] sm:$0xff]
  %v183 = vld [vmem:[%s3 + $0x8] sm:$0xff]
  %v184 = vld [vmem:[%s3 + $0x10] sm:$0xff]
  %v185 = vld [vmem:[%s3 + $0x18] sm:$0xff]
  %v186 = vld [vmem:[%s3 + $0x20] sm:$0xff]
  %v187 = vld [vmem:[%s3 + $0x28] sm:$0xff]
  %v188 = vld [vmem:[%s3 + $0x30] sm:$0xff]
  %v189 = vld [vmem:[%s3 + $0x38] sm:$0xff]
  %v190 = vld [vmem:[%s3 + $0x40] sm:$0xff]
  %v191 = vld [vmem:[%s3 + $0x48] sm:$0xff]
  %v192 = vld [vmem:[%s3 + $0x50] sm:$0xff]
  %v193 = vld [vmem:[%s3 + $0x58] sm:$0xff]
  %v194 = vld [vmem:[%s3 + $0x60] sm:$0xff]
  %v195 = vld [vmem:[%s3 + $0x68] sm:$0xff]
  %v196 = vld [vmem:[%s3 + $0x70] sm:$0xff]
  %v197 = vld [vmem:[%s3 + $0x78] sm:$0xff]
  %v198 = vld [vmem:[%s3 + $0x80] sm:$0xff]
  %v199 = vld [vmem:[%s3 + $0x88] sm:$0xff]
  %v200 = vld [vmem:[%s3 + $0x90] sm:$0xff]
  %v201 = vld [vmem:[%s3 + $0x98] sm:$0xff]
  %v202 = vld [vmem:[%s3 + $0xa0] sm:$0xff]
  %v203 = vld [vmem:[%s3 + $0xa8] sm:$0xff]
  %v204 = vld [vmem:[%s3 + $0xb0] sm:$0xff]
  %v205 = vld [vmem:[%s3 + $0xb8] sm:$0xff]
  %v206 = vld [vmem:[%s3 + $0xc0] sm:$0xff]
  %v207 = vld [vmem:[%s3 + $0xc8] sm:$0xff]
  %v208 = vld [vmem:[%s3 + $0xd0] sm:$0xff]
  %v209 = vld [vmem:[%s3 + $0xd8] sm:$0xff]
  %v210 = vld [vmem:[%s3 + $0xe0] sm:$0xff]
  %v211 = vld [vmem:[%s3 + $0xe8] sm:$0xff]
  %v212 = vld [vmem:[%s3 + $0xf0] sm:$0xff]
  %v213 = vld [vmem:[%s3 + $0xf8] sm:$0xff]
  %v214 = vld [vmem:[%s4] sm:$0x3]
  %v216 = vlaneseq
  %v217 = vshrl.u32 %v216, 7
  %v218 = vsub.s32 0, %v217
  %v219 = vrot.slane %v214, %v218
  %v220 = vlaneseq
  %v221 = vshrl.u32 %v220, 7
  %v222 = vsub.s32 1, %v221
  %v223 = vrot.slane %v214, %v222
  %v258 = vunpack.c.l.b16 %v182
  %v259 = vunpack.c.h.b16 %v182
  %v260 = vunpack.c.l.b16 %v183
  %v261 = vunpack.c.h.b16 %v183
  %v262 = vunpack.c.l.b16 %v184
  %v263 = vunpack.c.h.b16 %v184
  %v264 = vunpack.c.l.b16 %v185
  %v265 = vunpack.c.h.b16 %v185
  %v266 = vunpack.c.l.b16 %v186
  %v267 = vunpack.c.h.b16 %v186
  %v268 = vunpack.c.l.b16 %v187
  %v269 = vunpack.c.h.b16 %v187
  %v270 = vunpack.c.l.b16 %v188
  %v271 = vunpack.c.h.b16 %v188
  %v272 = vunpack.c.l.b16 %v189
  %v273 = vunpack.c.h.b16 %v189
  %v274 = vunpack.c.l.b16 %v190
  %v275 = vunpack.c.h.b16 %v190
  %v276 = vunpack.c.l.b16 %v191
  %v277 = vunpack.c.h.b16 %v191
  %v278 = vunpack.c.l.b16 %v192
  %v279 = vunpack.c.h.b16 %v192
  %v280 = vunpack.c.l.b16 %v193
  %v281 = vunpack.c.h.b16 %v193
  %v282 = vunpack.c.l.b16 %v194
  %v283 = vunpack.c.h.b16 %v194
  %v284 = vunpack.c.l.b16 %v195
  %v285 = vunpack.c.h.b16 %v195
  %v286 = vunpack.c.l.b16 %v196
  %v287 = vunpack.c.h.b16 %v196
  %v288 = vunpack.c.l.b16 %v197
  %v289 = vunpack.c.h.b16 %v197
  %v290 = vunpack.c.l.b16 %v198
  %v291 = vunpack.c.h.b16 %v198
  %v292 = vunpack.c.l.b16 %v199
  %v293 = vunpack.c.h.b16 %v199
  %v294 = vunpack.c.l.b16 %v200
  %v295 = vunpack.c.h.b16 %v200
  %v296 = vunpack.c.l.b16 %v201
  %v297 = vunpack.c.h.b16 %v201
  %v298 = vunpack.c.l.b16 %v202
  %v299 = vunpack.c.h.b16 %v202
  %v300 = vunpack.c.l.b16 %v203
  %v301 = vunpack.c.h.b16 %v203
  %v302 = vunpack.c.l.b16 %v204
  %v303 = vunpack.c.h.b16 %v204
  %v304 = vunpack.c.l.b16 %v205
  %v305 = vunpack.c.h.b16 %v205
  %v306 = vunpack.c.l.b16 %v206
  %v307 = vunpack.c.h.b16 %v206
  %v308 = vunpack.c.l.b16 %v207
  %v309 = vunpack.c.h.b16 %v207
  %v310 = vunpack.c.l.b16 %v208
  %v311 = vunpack.c.h.b16 %v208
  %v312 = vunpack.c.l.b16 %v209
  %v313 = vunpack.c.h.b16 %v209
  %v314 = vunpack.c.l.b16 %v210
  %v315 = vunpack.c.h.b16 %v210
  %v316 = vunpack.c.l.b16 %v211
  %v317 = vunpack.c.h.b16 %v211
  %v318 = vunpack.c.l.b16 %v212
  %v319 = vunpack.c.h.b16 %v212
  %v320 = vunpack.c.l.b16 %v213
  %v321 = vunpack.c.h.b16 %v213
  %v322 = vpack.c.b16 %v260, %v258
  %v323 = vpack.c.b16 %v261, %v259
  %v324 = vpack.c.b16 %v264, %v262
  %v325 = vpack.c.b16 %v265, %v263
  %v326 = vpack.c.b16 %v268, %v266
  %v327 = vpack.c.b16 %v269, %v267
  %v328 = vpack.c.b16 %v272, %v270
  %v329 = vpack.c.b16 %v273, %v271
  %v330 = vpack.c.b16 %v276, %v274
  %v331 = vpack.c.b16 %v277, %v275
  %v332 = vpack.c.b16 %v280, %v278
  %v333 = vpack.c.b16 %v281, %v279
  %v334 = vpack.c.b16 %v284, %v282
  %v335 = vpack.c.b16 %v285, %v283
  %v336 = vpack.c.b16 %v288, %v286
  %v337 = vpack.c.b16 %v289, %v287
  %v338 = vpack.c.b16 %v292, %v290
  %v339 = vpack.c.b16 %v293, %v291
  %v340 = vpack.c.b16 %v296, %v294
  %v341 = vpack.c.b16 %v297, %v295
  %v342 = vpack.c.b16 %v300, %v298
  %v343 = vpack.c.b16 %v301, %v299
  %v344 = vpack.c.b16 %v304, %v302
  %v345 = vpack.c.b16 %v305, %v303
  %v346 = vpack.c.b16 %v308, %v306
  %v347 = vpack.c.b16 %v309, %v307
  %v348 = vpack.c.b16 %v312, %v310
  %v349 = vpack.c.b16 %v313, %v311
  %v350 = vpack.c.b16 %v316, %v314
  %v351 = vpack.c.b16 %v317, %v315
  %v352 = vpack.c.b16 %v320, %v318
  %v353 = vpack.c.b16 %v321, %v319
  %386 = vmatprep.subr.bf16.mxu0 %v323
  %387 = vmatpush1.bf16.msra.mxu0 %v322
  %388 = vmatprep.subr.bf16.mxu0 %v325
  %389 = vmatpush1.bf16.msra.mxu0 %v324
  %390 = vmatprep.subr.bf16.mxu0 %v327
  %391 = vmatpush1.bf16.msra.mxu0 %v326
  %392 = vmatprep.subr.bf16.mxu0 %v329
  %393 = vmatpush1.bf16.msra.mxu0 %v328
  %394 = vmatprep.subr.bf16.mxu0 %v331
  %395 = vmatpush1.bf16.msra.mxu0 %v330
  %396 = vmatprep.subr.bf16.mxu0 %v333
  %397 = vmatpush1.bf16.msra.mxu0 %v332
  %398 = vmatprep.subr.bf16.mxu0 %v335
  %399 = vmatpush1.bf16.msra.mxu0 %v334
  %400 = vmatprep.subr.bf16.mxu0 %v337
  %401 = vmatpush1.bf16.msra.mxu0 %v336
  %402 = vmatprep.subr.bf16.mxu0 %v339
  %403 = vmatpush1.bf16.msra.mxu0 %v338
  %404 = vmatprep.subr.bf16.mxu0 %v341
  %405 = vmatpush1.bf16.msra.mxu0 %v340
  %406 = vmatprep.subr.bf16.mxu0 %v343
  %407 = vmatpush1.bf16.msra.mxu0 %v342
  %408 = vmatprep.subr.bf16.mxu0 %v345
  %409 = vmatpush1.bf16.msra.mxu0 %v344
  %410 = vmatprep.subr.bf16.mxu0 %v347
  %411 = vmatpush1.bf16.msra.mxu0 %v346
  %412 = vmatprep.subr.bf16.mxu0 %v349
  %413 = vmatpush1.bf16.msra.mxu0 %v348
  %414 = vmatprep.subr.bf16.mxu0 %v351
  %415 = vmatpush1.bf16.msra.mxu0 %v350
  %416 = vmatprep.subr.bf16.mxu0 %v353
  %417 = vmatpush1.bf16.msra.mxu0 %v352
  %418 = vmatprep.mubr.bf16.mxu0 %v181
  %419 = vmatmul.mubr.bf16.gmra.mrb[0].mxu0 %v180
  %v420 = vpop.f32.mrb[0].mxu0
  %v421 = vadd.f32 %v219, %v420
  %v422 = vpop.f32.mrb[0].mxu0
  %v423 = vadd.f32 %v223, %v422
  %v424 = vpop.f32.mrb[0].mxu0
  %v425 = vpop.f32.mrb[0].mxu0
  %426 = vdwg.mxu0
  %v427 = vmax.f32 %v421, 0.0
  %v428 = vmax.f32 %v423, 0.0
  %v429 = vpack.c.bf16 %v427, %v427
  %v430 = vpack.c.bf16 %v428, %v428
  %v431 = vld [vmem:[%s5] sm:$0xf]
  %v432 = vld [vmem:[%s5 + $0x4] sm:$0xf]
  %v433 = vld [vmem:[%s5 + $0x8] sm:$0xf]
  %v434 = vld [vmem:[%s5 + $0xc] sm:$0xf]
  %v435 = vld [vmem:[%s5 + $0x10] sm:$0xf]
  %v436 = vld [vmem:[%s5 + $0x14] sm:$0xf]
  %v437 = vld [vmem:[%s5 + $0x18] sm:$0xf]
  %v438 = vld [vmem:[%s5 + $0x1c] sm:$0xf]
  %v439 = vld [vmem:[%s5 + $0x20] sm:$0xf]
  %v440 = vld [vmem:[%s5 + $0x24] sm:$0xf]
  %v441 = vld [vmem:[%s5 + $0x28] sm:$0xf]
  %v442 = vld [vmem:[%s5 + $0x2c] sm:$0xf]
  %v443 = vld [vmem:[%s5 + $0x30] sm:$0xf]
  %v444 = vld [vmem:[%s5 + $0x34] sm:$0xf]
  %v445 = vld [vmem:[%s5 + $0x38] sm:$0xf]
  %v446 = vld [vmem:[%s5 + $0x3c] sm:$0xf]
  %v447 = vld [vmem:[%s5 + $0x40] sm:$0xf]
  %v448 = vld [vmem:[%s5 + $0x44] sm:$0xf]
  %v449 = vld [vmem:[%s5 + $0x48] sm:$0xf]
  %v450 = vld [vmem:[%s5 + $0x4c] sm:$0xf]
  %v451 = vld [vmem:[%s5 + $0x50] sm:$0xf]
  %v452 = vld [vmem:[%s5 + $0x54] sm:$0xf]
  %v453 = vld [vmem:[%s5 + $0x58] sm:$0xf]
  %v454 = vld [vmem:[%s5 + $0x5c] sm:$0xf]
  %v455 = vld [vmem:[%s5 + $0x60] sm:$0xf]
  %v456 = vld [vmem:[%s5 + $0x64] sm:$0xf]
  %v457 = vld [vmem:[%s5 + $0x68] sm:$0xf]
  %v458 = vld [vmem:[%s5 + $0x6c] sm:$0xf]
  %v459 = vld [vmem:[%s5 + $0x70] sm:$0xf]
  %v460 = vld [vmem:[%s5 + $0x74] sm:$0xf]
  %v461 = vld [vmem:[%s5 + $0x78] sm:$0xf]
  %v462 = vld [vmem:[%s5 + $0x7c] sm:$0xf]
  %v463 = vld [vmem:[%s6] sm:$0x1]
  %v465 = vlaneseq
  %v466 = vshrl.u32 %v465, 7
  %v467 = vsub.s32 0, %v466
  %v468 = vrot.slane %v463, %v467
  %v502 = vunpack.c.l.b16 %v431
  %v503 = vunpack.c.l.b16 %v432
  %v504 = vunpack.c.l.b16 %v433
  %v505 = vunpack.c.l.b16 %v434
  %v506 = vunpack.c.l.b16 %v435
  %v507 = vunpack.c.l.b16 %v436
  %v508 = vunpack.c.l.b16 %v437
  %v509 = vunpack.c.l.b16 %v438
  %v510 = vunpack.c.l.b16 %v439
  %v511 = vunpack.c.l.b16 %v440
  %v512 = vunpack.c.l.b16 %v441
  %v513 = vunpack.c.l.b16 %v442
  %v514 = vunpack.c.l.b16 %v443
  %v515 = vunpack.c.l.b16 %v444
  %v516 = vunpack.c.l.b16 %v445
  %v517 = vunpack.c.l.b16 %v446
  %v518 = vunpack.c.l.b16 %v447
  %v519 = vunpack.c.l.b16 %v448
  %v520 = vunpack.c.l.b16 %v449
  %v521 = vunpack.c.l.b16 %v450
  %v522 = vunpack.c.l.b16 %v451
  %v523 = vunpack.c.l.b16 %v452
  %v524 = vunpack.c.l.b16 %v453
  %v525 = vunpack.c.l.b16 %v454
  %v526 = vunpack.c.l.b16 %v455
  %v527 = vunpack.c.l.b16 %v456
  %v528 = vunpack.c.l.b16 %v457
  %v529 = vunpack.c.l.b16 %v458
  %v530 = vunpack.c.l.b16 %v459
  %v531 = vunpack.c.l.b16 %v460
  %v532 = vunpack.c.l.b16 %v461
  %v533 = vunpack.c.l.b16 %v462
  %v534 = vpack.c.b16 %v503, %v502
  %v535 = vpack.c.b16 %v505, %v504
  %v536 = vpack.c.b16 %v507, %v506
  %v537 = vpack.c.b16 %v509, %v508
  %v538 = vpack.c.b16 %v511, %v510
  %v539 = vpack.c.b16 %v513, %v512
  %v540 = vpack.c.b16 %v515, %v514
  %v541 = vpack.c.b16 %v517, %v516
  %v542 = vpack.c.b16 %v519, %v518
  %v543 = vpack.c.b16 %v521, %v520
  %v544 = vpack.c.b16 %v523, %v522
  %v545 = vpack.c.b16 %v525, %v524
  %v546 = vpack.c.b16 %v527, %v526
  %v547 = vpack.c.b16 %v529, %v528
  %v548 = vpack.c.b16 %v531, %v530
  %v549 = vpack.c.b16 %v533, %v532
  %566 = vmatprep.subr.bf16.mxu0 0
  %567 = vmatpush1.bf16.msra.mxu0 %v534
  %568 = vmatprep.subr.bf16.mxu0 0
  %569 = vmatpush1.bf16.msra.mxu0 %v535
  %570 = vmatprep.subr.bf16.mxu0 0
  %571 = vmatpush1.bf16.msra.mxu0 %v536
  %572 = vmatprep.subr.bf16.mxu0 0
  %573 = vmatpush1.bf16.msra.mxu0 %v537
  %574 = vmatprep.subr.bf16.mxu0 0
  %575 = vmatpush1.bf16.msra.mxu0 %v538
  %576 = vmatprep.subr.bf16.mxu0 0
  %577 = vmatpush1.bf16.msra.mxu0 %v539
  %578 = vmatprep.subr.bf16.mxu0 0
  %579 = vmatpush1.bf16.msra.mxu0 %v540
  %580 = vmatprep.subr.bf16.mxu0 0
  %581 = vmatpush1.bf16.msra.mxu0 %v541
  %582 = vmatprep.subr.bf16.mxu0 0
  %583 = vmatpush1.bf16.msra.mxu0 %v542
  %584 = vmatprep.subr.bf16.mxu0 0
  %585 = vmatpush1.bf16.msra.mxu0 %v543
  %586 = vmatprep.subr.bf16.mxu0 0
  %587 = vmatpush1.bf16.msra.mxu0 %v544
  %588 = vmatprep.subr.bf16.mxu0 0
  %589 = vmatpush1.bf16.msra.mxu0 %v545
  %590 = vmatprep.subr.bf16.mxu0 0
  %591 = vmatpush1.bf16.msra.mxu0 %v546
  %592 = vmatprep.subr.bf16.mxu0 0
  %593 = vmatpush1.bf16.msra.mxu0 %v547
  %594 = vmatprep.subr.bf16.mxu0 0
  %595 = vmatpush1.bf16.msra.mxu0 %v548
  %596 = vmatprep.subr.bf16.mxu0 0
  %597 = vmatpush1.bf16.msra.mxu0 %v549
  %598 = vmatprep.mubr.bf16.mxu0 %v430
  %599 = vmatmul.mubr.bf16.gmra.mrb[0].mxu0 %v429
  %v600 = vpop.f32.mrb[0].mxu0
  %v601 = vadd.f32 %v468, %v600
  %v602 = vpop.f32.mrb[0].mxu0
  %v603 = vpop.f32.mrb[0].mxu0
  %v604 = vpop.f32.mrb[0].mxu0
  %605 = vdwg.mxu0
  %vm606 = vcmask 261120
  %607 = vst.msk [vmem:[%s7] sm:$0xff] %vm606, %v601
  // Predicated region
  $region30: #{linear_extractor_forward.1} parent=0 // pred_check
    _
  $region31: #{linear_extractor_forward.1} parent=0 // pred_check_branch
    %609 = sbr.rel (0) target = $region33
  $region32: #{linear_extractor_forward.1} parent=0 // pred_region
    _
  $region33: #{linear_extractor_forward.1} parent=0 // pred_fallthru
    _
  // Predicated region
  $region34: #{linear_extractor_forward.1} parent=0 // pred_check
    _
  $region35: #{linear_extractor_forward.1} parent=0 // pred_check_branch
    %611 = sbr.rel (0) target = $region37
  $region36: #{linear_extractor_forward.1} parent=0 // pred_region
    _
  $region37: #{linear_extractor_forward.1} parent=0 // pred_fallthru
    _

</llo_original>
